<compile_context>
chip_gen: v7x
topology: tpu7x:2x2x1
jax: 0.10.0
libtpu: 0.0.40
codegen_flags: <defaults>
</compile_context>

<pallas_src>
import math

import jax
import jax.numpy as jnp
from jax.experimental import pallas as pl
from jax.experimental.pallas import tpu as pltpu


def _round_up(x, m):
    return (x + m - 1) // m * m


def _siren_kernel(x_ref, w_ref, b_ref, o_ref):
    # x_ref: (tm, dim_in), w_ref: (dim_in, tn), b_ref: (1, tn), o_ref: (tm, tn)
    x = x_ref[...]
    w = w_ref[...]
    if x.dtype != w.dtype:          # static (trace-time) branch: bf16 params
        x = x.astype(w.dtype)
    acc = jnp.dot(x, w, preferred_element_type=jnp.float32)
    acc = acc + b_ref[...].astype(jnp.float32)      # broadcast bias over rows
    o_ref[...] = jnp.sin(acc).astype(o_ref.dtype)   # w0 already folded in


def siren_forward(x, weight, bias=None, *, w0=1.0, tm=1024, tn=256,
                  param_dtype=None):
    """sin(w0 * (x @ weight.T + bias)) — PyTorch Siren.forward.

    x: (..., dim_in); weight: (dim_out, dim_in); bias: (dim_out,) or None.
    param_dtype: optional lower-precision matmul dtype for the weights
                 (e.g. jnp.bfloat16); x is cast inside the kernel, the
                 accumulation and sin epilogue stay in f32.
    """
    dim_out, dim_in = weight.shape
    lead = x.shape[:-1]
    x2 = x.reshape(-1, dim_in)
    M = x2.shape[0]

    w_dtype = param_dtype if param_dtype is not None else x.dtype
    out_dtype = x.dtype

    # Fold w0 into the linear layer: sin(w0*(xW^T + b)) == sin(x(w0*W)^T + w0*b)
    wt = (w0 * weight).T.astype(w_dtype)               # (dim_in, dim_out)
    if bias is None:
        b2 = jnp.zeros((1, dim_out), dtype=jnp.float32)
    else:
        b2 = (w0 * bias).reshape(1, dim_out).astype(jnp.float32)

    # Tile sizes. Row tiles must be multiples of 8; column tiles multiples of
    # 128 unless a single block covers the whole output-feature axis.
    tm = _round_up(max(tm, 8), 8)
    tn = _round_up(max(tn, 128), 128)
    tm_eff = min(tm, _round_up(M, 8))
    tn_eff = dim_out if dim_out <= tn else tn           # exact full-dim block

    in_b = jnp.dtype(x.dtype).itemsize
    w_b = jnp.dtype(w_dtype).itemsize
    out_b = jnp.dtype(out_dtype).itemsize

    # Generation-aware VMEM budget (~75% of physical capacity).
    try:
        vmem_phys = int(pltpu.get_tpu_info().vmem_capacity_bytes)
    except Exception:
        vmem_phys = 64 * 1024 * 1024
    vmem_cap = (vmem_phys * 3) // 4

    def _tile_bytes(rows):
        # double-buffered x / w / b / out tiles
        return 2 * (rows * dim_in * in_b
                    + dim_in * tn_eff * w_b
                    + tn_eff * 4
                    + rows * tn_eff * out_b)

    while tm_eff > 64 and _tile_bytes(tm_eff) > vmem_cap:
        tm_eff = _round_up(tm_eff // 2, 8)

    vmem_limit = int(min(max(2 * _tile_bytes(tm_eff), 16 * 1024 * 1024),
                         vmem_cap))

    m_tiles = pl.cdiv(M, tm_eff)
    n_tiles = pl.cdiv(dim_out, tn_eff)

    if n_tiles == 1:
        # Single weight block: weight residency is moot; make M the (only)
        # parallel axis so v7x's two TensorCores both get row tiles.
        grid = (m_tiles,)
        x_map = lambda i: (i, 0)
        w_map = lambda i: (0, 0)
        b_map = lambda i: (0, 0)
        o_map = lambda i: (i, 0)
        dims = ("parallel",)
    else:
        # M innermost so each weight column block stays VMEM-resident across
        # all row tiles.
        grid = (n_tiles, m_tiles)
        x_map = lambda n, i: (i, 0)
        w_map = lambda n, i: (0, n)
        b_map = lambda n, i: (0, n)
        o_map = lambda n, i: (i, n)
        dims = ("parallel", "parallel")

    cost = pl.CostEstimate(
        flops=2 * M * dim_in * dim_out,
        transcendentals=M * dim_out,
        bytes_accessed=(M * dim_in * in_b
                        + dim_in * dim_out * w_b
                        + dim_out * 4
                        + M * dim_out * out_b),
    )

    out = pl.pallas_call(
        _siren_kernel,
        out_shape=jax.ShapeDtypeStruct((M, dim_out), out_dtype),
        grid_spec=pltpu.PrefetchScalarGridSpec(
            num_scalar_prefetch=0,
            grid=grid,
            in_specs=[
                pl.BlockSpec((tm_eff, dim_in), x_map),
                pl.BlockSpec((dim_in, tn_eff), w_map),
                pl.BlockSpec((1, tn_eff), b_map),
            ],
            out_specs=pl.BlockSpec((tm_eff, tn_eff), o_map),
        ),
        compiler_params=pltpu.CompilerParams(
            dimension_semantics=dims,
            vmem_limit_bytes=vmem_limit),
        cost_estimate=cost,
    )(x2, wt, b2)

    return out.reshape(*lead, dim_out)


if __name__ == "__main__":
    # Module config (matches Siren(dim_in, dim_out, w0=1.0, c=6.0, use_bias=True))
    dim_in, dim_out = 32, 64
    w0, c = 1.0, 6.0
    batch, seq = 2, 16            # x: (2, 16, 32) -> flattened M = 32 rows

    key = jax.random.PRNGKey(0)
    kx, kw, kb = jax.random.split(key, 3)

    std = math.sqrt(c / dim_in)   # init_: weight.normal_(std=sqrt(c/dim_in))
    weight = std * jax.random.normal(kw, (dim_out, dim_in), dtype=jnp.float32)
    bias = std * jax.random.normal(kb, (dim_out,), dtype=jnp.float32)
    x = jax.random.normal(kx, (batch, seq, dim_in), dtype=jnp.float32)

    out = siren_forward(x, weight, bias, w0=w0)
    out = jax.block_until_ready(out)

    # Pure-JAX reference of the PyTorch forward: sin(w0 * (x @ W.T + b))
    ref = jnp.sin(w0 * (jnp.einsum("bsd,od->bso", x, weight) + bias))
    assert out.shape == (batch, seq, dim_out)
    assert jnp.allclose(out, ref, atol=1e-5, rtol=1e-5)

    print("KERNEL_OK")
</pallas_src>

<mosaic_0001>
module attributes {stable_mosaic.version = 11 : i64} {
  func.func @_siren_kernel(%arg0: i32, %arg1: memref<32x32xf32, #tpu.memory_space<vmem>>, %arg2: memref<32x64xf32, #tpu.memory_space<vmem>>, %arg3: memref<1x64xf32, #tpu.memory_space<vmem>>, %arg4: memref<32x64xf32, #tpu.memory_space<vmem>>) attributes {dimension_semantics = [#tpu.dimension_semantics<parallel>], iteration_bounds = array<i64: 1>, scalar_prefetch = 0 : i64, scratch_operands = 0 : i64, tpu.core_type = #tpu.core_type<tc>, window_params = [{transform_indices = @transform_0, window_bounds = array<i64: 32, 32>}, {pipeline_mode = #tpu.pipeline_mode<synchronous>, transform_indices = @transform_1, window_bounds = array<i64: 32, 64>}, {pipeline_mode = #tpu.pipeline_mode<synchronous>, transform_indices = @transform_2, window_bounds = array<i64: 1, 64>}, {transform_indices = @transform_3, window_bounds = array<i64: 32, 64>}]} {
    %c0 = arith.constant 0 : index
    %c0_0 = arith.constant 0 : index
    %0 = vector.load %arg1[%c0, %c0_0] : memref<32x32xf32, #tpu.memory_space<vmem>>, vector<32x32xf32>
    %c0_1 = arith.constant 0 : index
    %c0_2 = arith.constant 0 : index
    %1 = vector.load %arg2[%c0_1, %c0_2] : memref<32x64xf32, #tpu.memory_space<vmem>>, vector<32x64xf32>
    %cst = arith.constant dense<0.000000e+00> : vector<32x64xf32>
    %2 = tpu.matmul %0, %1, %cst {dimension_numbers = #tpu.dot_dimension_numbers<[1], [0], [0], [1], [0, 0, 1, 1], [], []>} : vector<32x32xf32>, vector<32x64xf32>, vector<32x64xf32> -> vector<32x64xf32>
    %c0_3 = arith.constant 0 : index
    %c0_4 = arith.constant 0 : index
    %3 = vector.load %arg3[%c0_3, %c0_4] : memref<1x64xf32, #tpu.memory_space<vmem>>, vector<1x64xf32>
    %4 = vector.broadcast %3 : vector<1x64xf32> to vector<32x64xf32>
    %5 = arith.addf %2, %4 : vector<32x64xf32>
    %6 = math.sin %5 : vector<32x64xf32>
    %c0_5 = arith.constant 0 : index
    %c0_6 = arith.constant 0 : index
    %7 = vector.load %arg4[%c0_5, %c0_6] : memref<32x64xf32, #tpu.memory_space<vmem>>, vector<32x64xf32>
    tpu.vector_store %arg4[%c0_5, %c0_6], %6 {strides = array<i32>} : memref<32x64xf32, #tpu.memory_space<vmem>>, vector<32x64xf32>,
    return
  }
  func.func @transform_0(%arg0: i32) -> (i32, i32) {
    %c0_i32 = arith.constant 0 : i32
    %c0_i32_0 = arith.constant 0 : i32
    return %arg0, %c0_i32 : i32, i32
  }
  func.func @transform_1(%arg0: i32) -> (i32, i32) {
    %c0_i32 = arith.constant 0 : i32
    %c0_i32_0 = arith.constant 0 : i32
    %c0_i32_1 = arith.constant 0 : i32
    return %c0_i32, %c0_i32_0 : i32, i32
  }
  func.func @transform_2(%arg0: i32) -> (i32, i32) {
    %c0_i32 = arith.constant 0 : i32
    %c0_i32_0 = arith.constant 0 : i32
    %c0_i32_1 = arith.constant 0 : i32
    return %c0_i32, %c0_i32_0 : i32, i32
  }
  func.func @transform_3(%arg0: i32) -> (i32, i32) {
    %c0_i32 = arith.constant 0 : i32
    %c0_i32_0 = arith.constant 0 : i32
    return %arg0, %c0_i32 : i32, i32
  }
}

</mosaic_0001>

<llo_original>
// kernel: tpu_custom_call.1
$region0: #{tpu_custom_call.1}
  #allocation0 [shape = 'u32[]', space=smem, size = 0x4, offset = 0x4, fixed_abs, tag = 'smem constant byte address 0x4 - core index']
  #allocation1 [shape = 'u32[144,128]{1,0:T(1,128)}', space=vmem, size = 0x12000, scoped, tag = 'internal scratch']
  %s0 = inlined_call_operand.hbm [shape: f32[32,32], index: 0, kind: input, shape index: {}]
  %s1 = inlined_call_operand.hbm [shape: f32[32,64], index: 1, kind: input, shape index: {}]
  %s2 = inlined_call_operand.vmem [shape: f32[1,64], index: 2, kind: input, shape index: {}]
  %s3 = inlined_call_operand.hbm [shape: f32[32,64], index: 3, kind: output, shape index: {}]
  %s4 = sld [smem:[#allocation0]]
  $region30: #{tpu_custom_call.1} parent=0
    _
  %s6 = ssub.s32 1, %s4
  %s7 = scalar_select 0, %s6, %s4
  $region1: #{tpu_custom_call.1} parent=0
    #allocation2 [shape = 'u8[16384]{0}', space=vmem, size = 0x4000, scoped, tag = 'input window, operand 0, single buffered']
    #allocation3 [shape = 's32[1]{0}', space=sflag, size = 0x4, scoped, tag = 'scoped memory for tpu_custom_call.1']
    #allocation4 [shape = 's32[1]{0}', space=sflag, size = 0x4, scoped, tag = 'scoped memory for tpu_custom_call.1']
    #allocation5 [shape = 'u8[16384]{0}', space=vmem, size = 0x4000, scoped, tag = 'input window, operand 1, single buffered']
    #allocation6 [shape = 's32[1]{0}', space=sflag, size = 0x4, scoped, tag = 'scoped memory for tpu_custom_call.1']
    #allocation7 [shape = 'u8[16384]{0}', space=vmem, size = 0x4000, scoped, tag = 'output window, operand 0, single buffered']
    %8 = vsyncpa [#allocation3], 0
    %9 = vsyncpa [#allocation6], 0
    %10 = vsyncpa [#allocation4], 0
    // Predicated region
    $region2: #{tpu_custom_call.1} parent=1 // pred_check
      _
    $region3: #{tpu_custom_call.1} parent=1 // pred_check_branch
      %12 = sbr.rel (0) target = $region5
    $region4: #{tpu_custom_call.1} parent=1 // pred_region
      %s14 = ssub.s32 512, 512
      %15 = vsyncadd [#allocation3], %s14
      %s16 = sshll.u32 [#allocation2], 4
      %s17 = int_to_ptr.vmem [resolvable:$true] %s16
      %22 = dma.hbm_to_vmem [thread:$0]  %s0, 512, %s17, [#allocation3], 128, 128, 8
    $region5: #{tpu_custom_call.1} parent=1 // pred_fallthru
      _
    // Predicated region
    $region6: #{tpu_custom_call.1} parent=1 // pred_check
      _
    $region7: #{tpu_custom_call.1} parent=1 // pred_check_branch
      %24 = sbr.rel (0) target = $region9
    $region8: #{tpu_custom_call.1} parent=1 // pred_region
      %s26 = ssub.s32 512, 512
      %27 = vsyncadd [#allocation6], %s26
      %s28 = sshll.u32 [#allocation5], 4
      %s29 = int_to_ptr.vmem [resolvable:$true] %s28
      %34 = dma.hbm_to_vmem [thread:$0]  %s1, 512, %s29, [#allocation6], 128, 128, 8
    $region9: #{tpu_custom_call.1} parent=1 // pred_fallthru
      _
    // Predicated region
    $region10: #{tpu_custom_call.1} parent=1 // pred_check
      _
    $region11: #{tpu_custom_call.1} parent=1 // pred_check_branch
      %36 = sbr.rel (0) target = $region13
    $region12: #{tpu_custom_call.1} parent=1 // pred_region
      _
    $region13: #{tpu_custom_call.1} parent=1 // pred_fallthru
      _
    // Predicated region
    $region14: #{tpu_custom_call.1} parent=1 // pred_check
      _
    $region15: #{tpu_custom_call.1} parent=1 // pred_check_branch
      %38 = sbr.rel (0) target = $region17
    $region16: #{tpu_custom_call.1} parent=1 // pred_region
      %39 = dma.done [#allocation3], 512
    $region17: #{tpu_custom_call.1} parent=1 // pred_fallthru
      _
    // Predicated region
    $region18: #{tpu_custom_call.1} parent=1 // pred_check
      _
    $region19: #{tpu_custom_call.1} parent=1 // pred_check_branch
      %41 = sbr.rel (0) target = $region21
    $region20: #{tpu_custom_call.1} parent=1 // pred_region
      %42 = dma.done [#allocation6], 512
    $region21: #{tpu_custom_call.1} parent=1 // pred_fallthru
      _
    %v43 = vld [vmem:[#allocation2] sm:$0xff]
    %v44 = vld [vmem:[#allocation2 + $0x8] sm:$0xff]
    %v45 = vld [vmem:[#allocation2 + $0x10] sm:$0xff]
    %v46 = vld [vmem:[#allocation2 + $0x18] sm:$0xff]
    %v47 = vld [vmem:[#allocation5] sm:$0xff]
    %v48 = vld [vmem:[#allocation5 + $0x8] sm:$0xff]
    %v49 = vld [vmem:[#allocation5 + $0x10] sm:$0xff]
    %v50 = vld [vmem:[#allocation5 + $0x18] sm:$0xff]
    %v51 = vld [vmem:[%s2] sm:$0x1]
    %v53 = vlaneseq
    %v54 = vshrl.u32 %v53, 7
    %v55 = vsub.s32 0, %v54
    %v56 = vrot.slane %v51, %v55
    %vm58 = vcmask 261120
    %v60 = vsel %vm58, %v43, 0
    %v63 = vsel %vm58, %v44, 0
    %v66 = vsel %vm58, %v45, 0
    %v69 = vsel %vm58, %v46, 0
    %71 = vmatprep.subr.mxu0 0.0
    %72 = vmatpush1.msra.mxu0 %v47
    %73 = vmatprep.subr.mxu0 0.0
    %74 = vmatpush1.msra.mxu0 %v48
    %75 = vmatprep.subr.mxu0 0.0
    %76 = vmatpush1.msra.mxu0 %v49
    %77 = vmatprep.subr.mxu0 0.0
    %78 = vmatpush1.msra.mxu0 %v50
    %79 = vmatprep.subr.mxu0 0.0
    %80 = vmatpush1.msra.mxu0 0.0
    %81 = vmatprep.subr.mxu0 0.0
    %82 = vmatpush1.msra.mxu0 0.0
    %83 = vmatprep.subr.mxu0 0.0
    %84 = vmatpush1.msra.mxu0 0.0
    %85 = vmatprep.subr.mxu0 0.0
    %86 = vmatpush1.msra.mxu0 0.0
    %87 = vmatprep.subr.mxu0 0.0
    %88 = vmatpush1.msra.mxu0 0.0
    %89 = vmatprep.subr.mxu0 0.0
    %90 = vmatpush1.msra.mxu0 0.0
    %91 = vmatprep.subr.mxu0 0.0
    %92 = vmatpush1.msra.mxu0 0.0
    %93 = vmatprep.subr.mxu0 0.0
    %94 = vmatpush1.msra.mxu0 0.0
    %95 = vmatprep.subr.mxu0 0.0
    %96 = vmatpush1.msra.mxu0 0.0
    %97 = vmatprep.subr.mxu0 0.0
    %98 = vmatpush1.msra.mxu0 0.0
    %99 = vmatprep.subr.mxu0 0.0
    %100 = vmatpush1.msra.mxu0 0.0
    %101 = vmatprep.subr.mxu0 0.0
    %102 = vmatpush1.msra.mxu0 0.0
    %103 = vmatprep.subr.mxu0 0.0
    %104 = vmatpush1.msra.mxu0 0.0
    %105 = vmatprep.subr.mxu0 0.0
    %106 = vmatpush1.msra.mxu0 0.0
    %107 = vmatprep.subr.mxu0 0.0
    %108 = vmatpush1.msra.mxu0 0.0
    %109 = vmatprep.subr.mxu0 0.0
    %110 = vmatpush1.msra.mxu0 0.0
    %111 = vmatprep.subr.mxu0 0.0
    %112 = vmatpush1.msra.mxu0 0.0
    %113 = vmatprep.subr.mxu0 0.0
    %114 = vmatpush1.msra.mxu0 0.0
    %115 = vmatprep.subr.mxu0 0.0
    %116 = vmatpush1.msra.mxu0 0.0
    %117 = vmatprep.subr.mxu0 0.0
    %118 = vmatpush1.msra.mxu0 0.0
    %119 = vmatprep.subr.mxu0 0.0
    %120 = vmatpush1.msra.mxu0 0.0
    %121 = vmatprep.subr.mxu0 0.0
    %122 = vmatpush1.msra.mxu0 0.0
    %123 = vmatprep.subr.mxu0 0.0
    %124 = vmatpush1.msra.mxu0 0.0
    %125 = vmatprep.subr.mxu0 0.0
    %126 = vmatpush1.msra.mxu0 0.0
    %127 = vmatprep.subr.mxu0 0.0
    %128 = vmatpush1.msra.mxu0 0.0
    %129 = vmatprep.subr.mxu0 0.0
    %130 = vmatpush1.msra.mxu0 0.0
    %131 = vmatprep.subr.mxu0 0.0
    %132 = vmatpush1.msra.mxu0 0.0
    %133 = vmatprep.subr.mxu0 0.0
    %134 = vmatpush1.msra.mxu0 0.0
    %135 = vmatprep.mubr.f32.mxu0 0.0
    %136 = vmatmul.mubr.f32.gmra.mrb[0].mxu0 %v60
    %v137 = vpop.f32.mrb[0].mxu0
    %v138 = vadd.f32 %v56, %v137
    %v139 = vpop.f32.mrb[0].mxu0
    %140 = vmatprep.mubr.f32.mxu0 0.0
    %141 = vmatmul.mubr.f32.gmra.mrb[0].mxu0 %v63
    %v142 = vpop.f32.mrb[0].mxu0
    %v143 = vadd.f32 %v56, %v142
    %v144 = vpop.f32.mrb[0].mxu0
    %145 = vmatprep.mubr.f32.mxu0 0.0
    %146 = vmatmul.mubr.f32.gmra.mrb[0].mxu0 %v66
    %v147 = vpop.f32.mrb[0].mxu0
    %v148 = vadd.f32 %v56, %v147
    %v149 = vpop.f32.mrb[0].mxu0
    %150 = vmatprep.mubr.f32.mxu0 0.0
    %151 = vmatmul.mubr.f32.gmra.mrb[0].mxu0 %v69
    %v152 = vpop.f32.mrb[0].mxu0
    %v153 = vadd.f32 %v56, %v152
    %v154 = vpop.f32.mrb[0].mxu0
    %155 = vdwg.mxu0
    %v156 = vand.u32 2147483647, %v138
    %vm157 = vcmp.le.f32.partialorder %v156, 0.7853982
    %vm158 = vcmp.lt.s32.totalorder %v138, 0
    %v159 = vand.u32 %v138, 2139095040
    %v160 = vshrl.u32 %v159, 23
    %v161 = vsub.s32 %v160, 127
    %v162 = vand.u32 2147483647, %v138
    %v163 = vand.u32 %v162, 8388607
    %v164 = vor.u32 %v163, 8388608
    %v165 = vsub.s32 0, %v164
    %v166 = vadd.s32 %v161, 1
    %vm167 = vcmp.gt.s32.totalorder %v166, 0
    %v168 = vsel %vm167, %v166, 0
    %v169 = vshrl.u32 %v168, 5
    %v170 = vand.u32 %v168, 31
    %v171 = vsub.s32 32, %v170
    %v172 = vshrl.u32 683565275, %v171
    %v173 = vshll.u32 683565275, %v170
    %v174 = vshrl.u32 2475754826, %v171
    %v175 = vor.u32 %v173, %v174
    %v176 = vshll.u32 2475754826, %v170
    %v177 = vshrl.u32 2131351028, %v171
    %v178 = vor.u32 %v176, %v177
    %v179 = vshll.u32 2131351028, %v170
    %v180 = vshrl.u32 2102212464, %v171
    %v181 = vor.u32 %v179, %v180
    %v182 = vshll.u32 2102212464, %v170
    %v183 = vshrl.u32 920167782, %v171
    %v184 = vor.u32 %v182, %v183
    %v185 = vshll.u32 920167782, %v170
    %v186 = vshrl.u32 1326507024, %v171
    %v187 = vor.u32 %v185, %v186
    %vm188 = vcmp.lt.s32.totalorder %v169, 1
    %vm189 = vcmp.lt.s32.totalorder %v169, 2
    %vm190 = vcmp.lt.s32.totalorder %v169, 3
    %vm191 = vcmp.lt.s32.totalorder %v169, 4
    %v192 = vsel %vm188, %v172, %v175
    %v193 = vsel %vm191, %v181, 2102212464
    %v194 = vsel %vm190, %v178, %v193
    %v195 = vsel %vm189, %v192, %v194
    %v196 = vsel %vm188, %v175, %v178
    %v197 = vsel %vm191, %v184, 920167782
    %v198 = vsel %vm190, %v181, %v197
    %v199 = vsel %vm189, %v196, %v198
    %v200 = vsel %vm188, %v178, %v181
    %v201 = vsel %vm191, %v187, 1326507024
    %v202 = vsel %vm190, %v184, %v201
    %v203 = vsel %vm189, %v200, %v202
    %v204 = vshll.u32 %v164, 8
    %v205 = vmul.u32.u64.compose %v204, %v203
    %v206 = vextract.low.u32 %v205
    %v207 = vextract.high.u32 %v205
    %v208 = vmul.u32.u64.compose %v204, %v199
    %v209 = vextract.low.u32 %v208
    %v210 = vextract.high.u32 %v208
    %v211 = vmul.u32 %v204, %v195
    %v212 = vadd.s32 %v207, %v209
    %vm213 = vc.u32 %v207, %v209
    %v214 = vadd.s32 %v210, 1
    %v215 = vsel %vm213, %v214, %v210
    %v216 = vadd.s32 %v211, %v215
    %v217 = vadd.s32 %v216, 536870912
    %v218 = vshrl.u32 %v217, 30
    %v219 = vshll.u32 %v218, 30
    %v220 = vsub.s32 %v216, %v219
    %vm221 = vcmp.lt.s32.totalorder %v220, 0
    %v222 = vsub.s32 0, %v220
    %v223 = vsel %vm221, %v222, %v220
    %v224 = vclz %v223
    %v225 = vsub.s32 %v224, 2
    %vm226 = vcmp.gt.s32.totalorder 0, %v225
    %v227 = vsel %vm226, 0, %v225
    %v228 = vsub.s32 32, %v227
    %v229 = vshll.u32 %v220, %v227
    %v230 = vshrl.u32 %v212, %v228
    %v231 = vor.u32 %v229, %v230
    %v232 = vsub.s32 4294967266, %v227
    %v233 = vadd.s32 %v232, 127
    %v234 = vshll.u32 %v233, 23
    %v235 = vor.u32 4788187, %v234
    %v236 = vand.u32 2147483647, %v235
    %v238 = vcvt.s32.f32 %v231
    %v239 = vmul.f32 %v238, %v236
    %v240 = vxor.u32 %v239, 2147483648
    %v241 = vsel %vm158, %v240, %v239
    %v242 = vsub.s32 4, %v218
    %v243 = vsel %vm158, %v242, %v218
    %v244 = vsel %vm157, %v138, %v241
    %v245 = vsel %vm157, 0, %v243
    %v246 = vcosq.f32.pop %v244
    %v247 = vsinq.f32.pop %v244
    %vm248 = vweird.f32 %v138
    %v249 = vadd.s32 %v245, 3
    %v250 = vand.u32 %v249, 3
    %vm251 = vcmp.lt.s32.totalorder %v250, 2
    %vm252 = vcmp.eq.s32.totalorder %v250, 0
    %v253 = vxor.u32 %v247, 2147483648
    %v254 = vsel %vm252, %v246, %v253
    %vm255 = vcmp.eq.s32.totalorder %v250, 2
    %v256 = vxor.u32 %v246, 2147483648
    %v257 = vsel %vm255, %v256, %v247
    %v258 = vsel %vm251, %v254, %v257
    %v259 = vsel %vm248, nan, %v258
    %v260 = vand.u32 2147483647, %v143
    %vm261 = vcmp.le.f32.partialorder %v260, 0.7853982
    %vm262 = vcmp.lt.s32.totalorder %v143, 0
    %v263 = vand.u32 %v143, 2139095040
    %v264 = vshrl.u32 %v263, 23
    %v265 = vsub.s32 %v264, 127
    %v266 = vand.u32 2147483647, %v143
    %v267 = vand.u32 %v266, 8388607
    %v268 = vor.u32 %v267, 8388608
    %v269 = vsub.s32 0, %v268
    %v270 = vadd.s32 %v265, 1
    %vm271 = vcmp.gt.s32.totalorder %v270, 0
    %v272 = vsel %vm271, %v270, 0
    %v273 = vshrl.u32 %v272, 5
    %v274 = vand.u32 %v272, 31
    %v275 = vsub.s32 32, %v274
    %v276 = vshrl.u32 683565275, %v275
    %v277 = vshll.u32 683565275, %v274
    %v278 = vshrl.u32 2475754826, %v275
    %v279 = vor.u32 %v277, %v278
    %v280 = vshll.u32 2475754826, %v274
    %v281 = vshrl.u32 2131351028, %v275
    %v282 = vor.u32 %v280, %v281
    %v283 = vshll.u32 2131351028, %v274
    %v284 = vshrl.u32 2102212464, %v275
    %v285 = vor.u32 %v283, %v284
    %v286 = vshll.u32 2102212464, %v274
    %v287 = vshrl.u32 920167782, %v275
    %v288 = vor.u32 %v286, %v287
    %v289 = vshll.u32 920167782, %v274
    %v290 = vshrl.u32 1326507024, %v275
    %v291 = vor.u32 %v289, %v290
    %vm292 = vcmp.lt.s32.totalorder %v273, 1
    %vm293 = vcmp.lt.s32.totalorder %v273, 2
    %vm294 = vcmp.lt.s32.totalorder %v273, 3
    %vm295 = vcmp.lt.s32.totalorder %v273, 4
    %v296 = vsel %vm292, %v276, %v279
    %v297 = vsel %vm295, %v285, 2102212464
    %v298 = vsel %vm294, %v282, %v297
    %v299 = vsel %vm293, %v296, %v298
    %v300 = vsel %vm292, %v279, %v282
    %v301 = vsel %vm295, %v288, 920167782
    %v302 = vsel %vm294, %v285, %v301
    %v303 = vsel %vm293, %v300, %v302
    %v304 = vsel %vm292, %v282, %v285
    %v305 = vsel %vm295, %v291, 1326507024
    %v306 = vsel %vm294, %v288, %v305
    %v307 = vsel %vm293, %v304, %v306
    %v308 = vshll.u32 %v268, 8
    %v309 = vmul.u32.u64.compose %v308, %v307
    %v310 = vextract.low.u32 %v309
    %v311 = vextract.high.u32 %v309
    %v312 = vmul.u32.u64.compose %v308, %v303
    %v313 = vextract.low.u32 %v312
    %v314 = vextract.high.u32 %v312
    %v315 = vmul.u32 %v308, %v299
    %v316 = vadd.s32 %v311, %v313
    %vm317 = vc.u32 %v311, %v313
    %v318 = vadd.s32 %v314, 1
    %v319 = vsel %vm317, %v318, %v314
    %v320 = vadd.s32 %v315, %v319
    %v321 = vadd.s32 %v320, 536870912
    %v322 = vshrl.u32 %v321, 30
    %v323 = vshll.u32 %v322, 30
    %v324 = vsub.s32 %v320, %v323
    %vm325 = vcmp.lt.s32.totalorder %v324, 0
    %v326 = vsub.s32 0, %v324
    %v327 = vsel %vm325, %v326, %v324
    %v328 = vclz %v327
    %v329 = vsub.s32 %v328, 2
    %vm330 = vcmp.gt.s32.totalorder 0, %v329
    %v331 = vsel %vm330, 0, %v329
    %v332 = vsub.s32 32, %v331
    %v333 = vshll.u32 %v324, %v331
    %v334 = vshrl.u32 %v316, %v332
    %v335 = vor.u32 %v333, %v334
    %v336 = vsub.s32 4294967266, %v331
    %v337 = vadd.s32 %v336, 127
    %v338 = vshll.u32 %v337, 23
    %v339 = vor.u32 4788187, %v338
    %v340 = vand.u32 2147483647, %v339
    %v342 = vcvt.s32.f32 %v335
    %v343 = vmul.f32 %v342, %v340
    %v344 = vxor.u32 %v343, 2147483648
    %v345 = vsel %vm262, %v344, %v343
    %v346 = vsub.s32 4, %v322
    %v347 = vsel %vm262, %v346, %v322
    %v348 = vsel %vm261, %v143, %v345
    %v349 = vsel %vm261, 0, %v347
    %v350 = vcosq.f32.pop %v348
    %v351 = vsinq.f32.pop %v348
    %vm352 = vweird.f32 %v143
    %v353 = vadd.s32 %v349, 3
    %v354 = vand.u32 %v353, 3
    %vm355 = vcmp.lt.s32.totalorder %v354, 2
    %vm356 = vcmp.eq.s32.totalorder %v354, 0
    %v357 = vxor.u32 %v351, 2147483648
    %v358 = vsel %vm356, %v350, %v357
    %vm359 = vcmp.eq.s32.totalorder %v354, 2
    %v360 = vxor.u32 %v350, 2147483648
    %v361 = vsel %vm359, %v360, %v351
    %v362 = vsel %vm355, %v358, %v361
    %v363 = vsel %vm352, nan, %v362
    %v364 = vand.u32 2147483647, %v148
    %vm365 = vcmp.le.f32.partialorder %v364, 0.7853982
    %vm366 = vcmp.lt.s32.totalorder %v148, 0
    %v367 = vand.u32 %v148, 2139095040
    %v368 = vshrl.u32 %v367, 23
    %v369 = vsub.s32 %v368, 127
    %v370 = vand.u32 2147483647, %v148
    %v371 = vand.u32 %v370, 8388607
    %v372 = vor.u32 %v371, 8388608
    %v373 = vsub.s32 0, %v372
    %v374 = vadd.s32 %v369, 1
    %vm375 = vcmp.gt.s32.totalorder %v374, 0
    %v376 = vsel %vm375, %v374, 0
    %v377 = vshrl.u32 %v376, 5
    %v378 = vand.u32 %v376, 31
    %v379 = vsub.s32 32, %v378
    %v380 = vshrl.u32 683565275, %v379
    %v381 = vshll.u32 683565275, %v378
    %v382 = vshrl.u32 2475754826, %v379
    %v383 = vor.u32 %v381, %v382
    %v384 = vshll.u32 2475754826, %v378
    %v385 = vshrl.u32 2131351028, %v379
    %v386 = vor.u32 %v384, %v385
    %v387 = vshll.u32 2131351028, %v378
    %v388 = vshrl.u32 2102212464, %v379
    %v389 = vor.u32 %v387, %v388
    %v390 = vshll.u32 2102212464, %v378
    %v391 = vshrl.u32 920167782, %v379
    %v392 = vor.u32 %v390, %v391
    %v393 = vshll.u32 920167782, %v378
    %v394 = vshrl.u32 1326507024, %v379
    %v395 = vor.u32 %v393, %v394
    %vm396 = vcmp.lt.s32.totalorder %v377, 1
    %vm397 = vcmp.lt.s32.totalorder %v377, 2
    %vm398 = vcmp.lt.s32.totalorder %v377, 3
    %vm399 = vcmp.lt.s32.totalorder %v377, 4
    %v400 = vsel %vm396, %v380, %v383
    %v401 = vsel %vm399, %v389, 2102212464
    %v402 = vsel %vm398, %v386, %v401
    %v403 = vsel %vm397, %v400, %v402
    %v404 = vsel %vm396, %v383, %v386
    %v405 = vsel %vm399, %v392, 920167782
    %v406 = vsel %vm398, %v389, %v405
    %v407 = vsel %vm397, %v404, %v406
    %v408 = vsel %vm396, %v386, %v389
    %v409 = vsel %vm399, %v395, 1326507024
    %v410 = vsel %vm398, %v392, %v409
    %v411 = vsel %vm397, %v408, %v410
    %v412 = vshll.u32 %v372, 8
    %v413 = vmul.u32.u64.compose %v412, %v411
    %v414 = vextract.low.u32 %v413
    %v415 = vextract.high.u32 %v413
    %v416 = vmul.u32.u64.compose %v412, %v407
    %v417 = vextract.low.u32 %v416
    %v418 = vextract.high.u32 %v416
    %v419 = vmul.u32 %v412, %v403
    %v420 = vadd.s32 %v415, %v417
    %vm421 = vc.u32 %v415, %v417
    %v422 = vadd.s32 %v418, 1
    %v423 = vsel %vm421, %v422, %v418
    %v424 = vadd.s32 %v419, %v423
    %v425 = vadd.s32 %v424, 536870912
    %v426 = vshrl.u32 %v425, 30
    %v427 = vshll.u32 %v426, 30
    %v428 = vsub.s32 %v424, %v427
    %vm429 = vcmp.lt.s32.totalorder %v428, 0
    %v430 = vsub.s32 0, %v428
    %v431 = vsel %vm429, %v430, %v428
    %v432 = vclz %v431
    %v433 = vsub.s32 %v432, 2
    %vm434 = vcmp.gt.s32.totalorder 0, %v433
    %v435 = vsel %vm434, 0, %v433
    %v436 = vsub.s32 32, %v435
    %v437 = vshll.u32 %v428, %v435
    %v438 = vshrl.u32 %v420, %v436
    %v439 = vor.u32 %v437, %v438
    %v440 = vsub.s32 4294967266, %v435
    %v441 = vadd.s32 %v440, 127
    %v442 = vshll.u32 %v441, 23
    %v443 = vor.u32 4788187, %v442
    %v444 = vand.u32 2147483647, %v443
    %v446 = vcvt.s32.f32 %v439
    %v447 = vmul.f32 %v446, %v444
    %v448 = vxor.u32 %v447, 2147483648
    %v449 = vsel %vm366, %v448, %v447
    %v450 = vsub.s32 4, %v426
    %v451 = vsel %vm366, %v450, %v426
    %v452 = vsel %vm365, %v148, %v449
    %v453 = vsel %vm365, 0, %v451
    %v454 = vcosq.f32.pop %v452
    %v455 = vsinq.f32.pop %v452
    %vm456 = vweird.f32 %v148
    %v457 = vadd.s32 %v453, 3
    %v458 = vand.u32 %v457, 3
    %vm459 = vcmp.lt.s32.totalorder %v458, 2
    %vm460 = vcmp.eq.s32.totalorder %v458, 0
    %v461 = vxor.u32 %v455, 2147483648
    %v462 = vsel %vm460, %v454, %v461
    %vm463 = vcmp.eq.s32.totalorder %v458, 2
    %v464 = vxor.u32 %v454, 2147483648
    %v465 = vsel %vm463, %v464, %v455
    %v466 = vsel %vm459, %v462, %v465
    %v467 = vsel %vm456, nan, %v466
    %v468 = vand.u32 2147483647, %v153
    %vm469 = vcmp.le.f32.partialorder %v468, 0.7853982
    %vm470 = vcmp.lt.s32.totalorder %v153, 0
    %v471 = vand.u32 %v153, 2139095040
    %v472 = vshrl.u32 %v471, 23
    %v473 = vsub.s32 %v472, 127
    %v474 = vand.u32 2147483647, %v153
    %v475 = vand.u32 %v474, 8388607
    %v476 = vor.u32 %v475, 8388608
    %v477 = vsub.s32 0, %v476
    %v478 = vadd.s32 %v473, 1
    %vm479 = vcmp.gt.s32.totalorder %v478, 0
    %v480 = vsel %vm479, %v478, 0
    %v481 = vshrl.u32 %v480, 5
    %v482 = vand.u32 %v480, 31
    %v483 = vsub.s32 32, %v482
    %v484 = vshrl.u32 683565275, %v483
    %v485 = vshll.u32 683565275, %v482
    %v486 = vshrl.u32 2475754826, %v483
    %v487 = vor.u32 %v485, %v486
    %v488 = vshll.u32 2475754826, %v482
    %v489 = vshrl.u32 2131351028, %v483
    %v490 = vor.u32 %v488, %v489
    %v491 = vshll.u32 2131351028, %v482
    %v492 = vshrl.u32 2102212464, %v483
    %v493 = vor.u32 %v491, %v492
    %v494 = vshll.u32 2102212464, %v482
    %v495 = vshrl.u32 920167782, %v483
    %v496 = vor.u32 %v494, %v495
    %v497 = vshll.u32 920167782, %v482
    %v498 = vshrl.u32 1326507024, %v483
    %v499 = vor.u32 %v497, %v498
    %vm500 = vcmp.lt.s32.totalorder %v481, 1
    %vm501 = vcmp.lt.s32.totalorder %v481, 2
    %vm502 = vcmp.lt.s32.totalorder %v481, 3
    %vm503 = vcmp.lt.s32.totalorder %v481, 4
    %v504 = vsel %vm500, %v484, %v487
    %v505 = vsel %vm503, %v493, 2102212464
    %v506 = vsel %vm502, %v490, %v505
    %v507 = vsel %vm501, %v504, %v506
    %v508 = vsel %vm500, %v487, %v490
    %v509 = vsel %vm503, %v496, 920167782
    %v510 = vsel %vm502, %v493, %v509
    %v511 = vsel %vm501, %v508, %v510
    %v512 = vsel %vm500, %v490, %v493
    %v513 = vsel %vm503, %v499, 1326507024
    %v514 = vsel %vm502, %v496, %v513
    %v515 = vsel %vm501, %v512, %v514
    %v516 = vshll.u32 %v476, 8
    %v517 = vmul.u32.u64.compose %v516, %v515
    %v518 = vextract.low.u32 %v517
    %v519 = vextract.high.u32 %v517
    %v520 = vmul.u32.u64.compose %v516, %v511
    %v521 = vextract.low.u32 %v520
    %v522 = vextract.high.u32 %v520
    %v523 = vmul.u32 %v516, %v507
    %v524 = vadd.s32 %v519, %v521
    %vm525 = vc.u32 %v519, %v521
    %v526 = vadd.s32 %v522, 1
    %v527 = vsel %vm525, %v526, %v522
    %v528 = vadd.s32 %v523, %v527
    %v529 = vadd.s32 %v528, 536870912
    %v530 = vshrl.u32 %v529, 30
    %v531 = vshll.u32 %v530, 30
    %v532 = vsub.s32 %v528, %v531
    %vm533 = vcmp.lt.s32.totalorder %v532, 0
    %v534 = vsub.s32 0, %v532
    %v535 = vsel %vm533, %v534, %v532
    %v536 = vclz %v535
    %v537 = vsub.s32 %v536, 2
    %vm538 = vcmp.gt.s32.totalorder 0, %v537
    %v539 = vsel %vm538, 0, %v537
    %v540 = vsub.s32 32, %v539
    %v541 = vshll.u32 %v532, %v539
    %v542 = vshrl.u32 %v524, %v540
    %v543 = vor.u32 %v541, %v542
    %v544 = vsub.s32 4294967266, %v539
    %v545 = vadd.s32 %v544, 127
    %v546 = vshll.u32 %v545, 23
    %v547 = vor.u32 4788187, %v546
    %v548 = vand.u32 2147483647, %v547
    %v550 = vcvt.s32.f32 %v543
    %v551 = vmul.f32 %v550, %v548
    %v552 = vxor.u32 %v551, 2147483648
    %v553 = vsel %vm470, %v552, %v551
    %v554 = vsub.s32 4, %v530
    %v555 = vsel %vm470, %v554, %v530
    %v556 = vsel %vm469, %v153, %v553
    %v557 = vsel %vm469, 0, %v555
    %v558 = vcosq.f32.pop %v556
    %v559 = vsinq.f32.pop %v556
    %vm560 = vweird.f32 %v153
    %v561 = vadd.s32 %v557, 3
    %v562 = vand.u32 %v561, 3
    %vm563 = vcmp.lt.s32.totalorder %v562, 2
    %vm564 = vcmp.eq.s32.totalorder %v562, 0
    %v565 = vxor.u32 %v559, 2147483648
    %v566 = vsel %vm564, %v558, %v565
    %vm567 = vcmp.eq.s32.totalorder %v562, 2
    %v568 = vxor.u32 %v558, 2147483648
    %v569 = vsel %vm567, %v568, %v559
    %v570 = vsel %vm563, %v566, %v569
    %v571 = vsel %vm560, nan, %v570
    %vm572 = vcmask 523264
    %573 = vst.msk [vmem:[#allocation7] sm:$0xff] %vm572, %v259
    %574 = vst.msk [vmem:[#allocation7 + $0x8] sm:$0xff] %vm572, %v363
    %575 = vst.msk [vmem:[#allocation7 + $0x10] sm:$0xff] %vm572, %v467
    %576 = vst.msk [vmem:[#allocation7 + $0x18] sm:$0xff] %vm572, %v571
    // Predicated region
    $region22: #{tpu_custom_call.1} parent=1 // pred_check
      _
    $region23: #{tpu_custom_call.1} parent=1 // pred_check_branch
      %578 = sbr.rel (0) target = $region25
    $region24: #{tpu_custom_call.1} parent=1 // pred_region
      %s580 = ssub.s32 512, 512
      %581 = vsyncadd [#allocation4], %s580
      %s582 = sshll.u32 [#allocation7], 4
      %s583 = int_to_ptr.vmem [resolvable:$true] %s582
      %588 = dma.vmem_to_hbm [thread:$0]  %s583, 512, %s3, [#allocation4], 128, 128, 8
    $region25: #{tpu_custom_call.1} parent=1 // pred_fallthru
      _
    // Predicated region
    $region26: #{tpu_custom_call.1} parent=1 // pred_check
      _
    $region27: #{tpu_custom_call.1} parent=1 // pred_check_branch
      %590 = sbr.rel (0) target = $region29
    $region28: #{tpu_custom_call.1} parent=1 // pred_region
      %591 = dma.done [#allocation4], 512
    $region29: #{tpu_custom_call.1} parent=1 // pred_fallthru
      _
    %592 = vsyncpa [#allocation3], 1
    %593 = vsyncpa [#allocation6], 1
    %594 = vsyncpa [#allocation4], 1

</llo_original>
